<compile_context>
chip_gen: v5e
topology: v5e:2x2
jax: 0.10.0
libtpu: 0.0.40
codegen_flags: <defaults>
</compile_context>

<pallas_src>
import jax
import jax.numpy as jnp
from jax.experimental import pallas as pl
from jax.experimental.pallas import tpu as pltpu

_LANE = 128
_SUBLANE = 8


def _round_up(x, m):
    return ((x + m - 1) // m) * m


def _mlp_actor_kernel(x_ref, *refs):
    """Fused MLP forward. refs = (w0, b0, w1, b1, ..., wL, bL, o_ref)."""
    o_ref = refs[-1]
    param_refs = refs[:-1]
    n_layers = len(param_refs) // 2

    x = x_ref[...]                                     # bf16 activations -> MXU
    y = None
    for j in range(n_layers):
        w = param_refs[2 * j][...]                     # bf16 [Din_p, Dout_p]
        b = param_refs[2 * j + 1][...]                 # f32  [1, Dout_p] (broadcasts)
        y = jnp.dot(x, w, preferred_element_type=jnp.float32) + b   # f32 accumulate
        if j < n_layers - 1:
            # ReLU in f32 (VPU), recast to bf16 only to feed the next MXU pass.
            x = jnp.maximum(y, 0.0).astype(x_ref.dtype)
        else:
            y = jnp.tanh(y)                            # output activation in f32 (EUP)
    o_ref[...] = y.astype(o_ref.dtype)


def prepare_mlp_actor_params(params):
    """Zero-pad feature dims to lane multiples (128); weights -> bf16, biases -> f32.

    params: list of (w [Din, Dout], b [1, Dout] or [Dout]) in float32.
    Zero padding is exact: padded hidden units are ReLU(0)=0 and feed zero
    weight rows; padded output columns are tanh(0)=0 and get sliced away.
    """
    prepared = []
    for w, b in params:
        din, dout = w.shape
        b = jnp.reshape(b, (1, dout))
        din_p, dout_p = _round_up(din, _LANE), _round_up(dout, _LANE)
        wp = jnp.zeros((din_p, dout_p), jnp.bfloat16)
        wp = wp.at[:din, :dout].set(w.astype(jnp.bfloat16))
        bp = jnp.zeros((1, dout_p), jnp.float32)
        bp = bp.at[:, :dout].set(b.astype(jnp.float32))
        prepared.append((wp, bp))
    return prepared


def mlp_actor_forward(prepared_params, obs, act_dim, *, batch_tile=None):
    """obs: [B, obs_dim] -> actions [B, act_dim] (same float dtype as obs)."""
    B, obs_dim = obs.shape
    out_dtype = obs.dtype
    d_in_p = prepared_params[0][0].shape[0]
    d_out_p = prepared_params[-1][0].shape[1]
    assert obs_dim <= d_in_p and act_dim <= d_out_p

    # Batch tiling: large tiles amortize per-grid-step overhead, but keep >= 2
    # steps when the batch allows so v7x's second TensorCore gets work.
    if batch_tile is None:
        batch_tile = min(_round_up(B, _SUBLANE), 1024)
        if B > _SUBLANE:
            batch_tile = min(batch_tile, _round_up((B + 1) // 2, _SUBLANE))
    batch_tile = max(_SUBLANE, _round_up(batch_tile, _SUBLANE))
    B_pad = _round_up(B, batch_tile)
    nb = B_pad // batch_tile

    # Pad obs to [B_pad, d_in_p] and cast the matmul operand to bf16 (halves HBM reads).
    x = jnp.zeros((B_pad, d_in_p), jnp.bfloat16)
    x = x.at[:B, :obs_dim].set(obs.astype(jnp.bfloat16))

    in_specs = [pl.BlockSpec((batch_tile, d_in_p), lambda i: (i, 0))]
    flat_params = []
    for w, b in prepared_params:
        # Full-array blocks, constant index maps -> VMEM-resident; single-buffered
        # since the block never changes across grid steps.
        in_specs.append(pl.BlockSpec(w.shape, lambda i: (0, 0),
                                     pipeline_mode=pl.Buffered(1)))
        in_specs.append(pl.BlockSpec(b.shape, lambda i: (0, 0),
                                     pipeline_mode=pl.Buffered(1)))
        flat_params += [w, b]

    # Cost estimate (advisory) and an explicit VMEM budget.
    flops = 2 * B_pad * sum(int(w.shape[0]) * int(w.shape[1]) for w, _ in prepared_params)
    param_bytes = sum(int(w.size) * w.dtype.itemsize + int(b.size) * b.dtype.itemsize
                      for w, b in prepared_params)
    out_itemsize = jnp.dtype(out_dtype).itemsize
    bytes_accessed = int(x.size) * 2 + param_bytes + B_pad * d_out_p * out_itemsize
    max_feat = max(d_in_p, max(int(w.shape[1]) for w, _ in prepared_params))
    io_est = 2 * batch_tile * (d_in_p * 2 + d_out_p * out_itemsize)   # double-buffered act I/O
    scratch_est = 6 * batch_tile * max_feat * 4                        # live f32 intermediates
    vmem_limit = int(min(64 << 20,
                         max(32 << 20, param_bytes + io_est + scratch_est + (4 << 20))))

    out = pl.pallas_call(
        _mlp_actor_kernel,
        out_shape=jax.ShapeDtypeStruct((B_pad, d_out_p), out_dtype),
        grid=(nb,),
        in_specs=in_specs,
        out_specs=pl.BlockSpec((batch_tile, d_out_p), lambda i: (i, 0)),
        compiler_params=pltpu.CompilerParams(
            dimension_semantics=("parallel",),
            vmem_limit_bytes=vmem_limit),
        cost_estimate=pl.CostEstimate(
            flops=int(flops),
            transcendentals=int(B_pad * d_out_p),
            bytes_accessed=int(bytes_accessed)),
    )(x, *flat_params)

    return out[:B, :act_dim]


def init_mlp_params(key, sizes):
    """Deterministic PyTorch-Linear-style init: U(-1/sqrt(fan_in), 1/sqrt(fan_in))."""
    params = []
    for j in range(len(sizes) - 1):
        fan_in, fan_out = sizes[j], sizes[j + 1]
        key, kw, kb = jax.random.split(key, 3)
        bound = 1.0 / jnp.sqrt(jnp.float32(fan_in))
        w = jax.random.uniform(kw, (fan_in, fan_out), jnp.float32, -bound, bound)
        b = jax.random.uniform(kb, (1, fan_out), jnp.float32, -bound, bound)
        params.append((w, b))
    return params


if __name__ == "__main__":
    # Small shapes consistent with the module.
    batch = 8
    obs_dim = 16
    act_dim = 8
    hidden_sizes = (32, 32)

    key = jax.random.PRNGKey(0)
    k_obs, k_params = jax.random.split(key, 2)

    obs = jax.random.normal(k_obs, (batch, obs_dim), jnp.float32)

    sizes = [obs_dim] + list(hidden_sizes) + [act_dim]
    params = init_mlp_params(k_params, sizes)
    prepared = prepare_mlp_actor_params(params)

    fwd = jax.jit(lambda o: mlp_actor_forward(prepared, o, act_dim))
    out = jax.block_until_ready(fwd(obs))

    # Reference 1: identical math in plain JAX (bf16 operands, f32 accumulate/ReLU/tanh).
    n = len(params)
    xr = obs
    for j, (w, b) in enumerate(params):
        yr = jnp.dot(xr.astype(jnp.bfloat16), w.astype(jnp.bfloat16),
                     preferred_element_type=jnp.float32) + b
        xr = jnp.maximum(yr, 0.0).astype(jnp.bfloat16) if j < n - 1 else jnp.tanh(yr)
    ref_bf16 = xr

    # Reference 2: full-f32 math (the PyTorch module), loose tolerance for bf16 operands.
    xf = obs
    for j, (w, b) in enumerate(params):
        xf = xf @ w + b
        xf = jnp.maximum(xf, 0.0) if j < n - 1 else jnp.tanh(xf)

    assert out.shape == (batch, act_dim)
    assert jnp.allclose(out, ref_bf16, atol=1e-4, rtol=1e-4)
    assert jnp.allclose(out, xf, atol=3e-2, rtol=3e-2)

    print("KERNEL_OK")
</pallas_src>

<mosaic_0001>
module attributes {stable_mosaic.version = 11 : i64} {
  func.func @_mlp_actor_kernel(%arg0: i32, %arg1: memref<8x128xbf16, #tpu.memory_space<vmem>>, %arg2: memref<128x128xbf16, #tpu.memory_space<vmem>>, %arg3: memref<1x128xf32, #tpu.memory_space<vmem>>, %arg4: memref<128x128xbf16, #tpu.memory_space<vmem>>, %arg5: memref<1x128xf32, #tpu.memory_space<vmem>>, %arg6: memref<128x128xbf16, #tpu.memory_space<vmem>>, %arg7: memref<1x128xf32, #tpu.memory_space<vmem>>, %arg8: memref<8x128xf32, #tpu.memory_space<vmem>>) attributes {dimension_semantics = [#tpu.dimension_semantics<parallel>], iteration_bounds = array<i64: 1>, scalar_prefetch = 0 : i64, scratch_operands = 0 : i64, tpu.core_type = #tpu.core_type<tc>, window_params = [{transform_indices = @transform_0, window_bounds = array<i64: 8, 128>}, {pipeline_mode = #tpu.pipeline_mode<synchronous>, transform_indices = @transform_1, window_bounds = array<i64: 128, 128>}, {pipeline_mode = #tpu.pipeline_mode<synchronous>, transform_indices = @transform_2, window_bounds = array<i64: 1, 128>}, {pipeline_mode = #tpu.pipeline_mode<synchronous>, transform_indices = @transform_3, window_bounds = array<i64: 128, 128>}, {pipeline_mode = #tpu.pipeline_mode<synchronous>, transform_indices = @transform_4, window_bounds = array<i64: 1, 128>}, {pipeline_mode = #tpu.pipeline_mode<synchronous>, transform_indices = @transform_5, window_bounds = array<i64: 128, 128>}, {pipeline_mode = #tpu.pipeline_mode<synchronous>, transform_indices = @transform_6, window_bounds = array<i64: 1, 128>}, {transform_indices = @transform_7, window_bounds = array<i64: 8, 128>}]} {
    %c0 = arith.constant 0 : index
    %c0_0 = arith.constant 0 : index
    %0 = vector.load %arg1[%c0, %c0_0] : memref<8x128xbf16, #tpu.memory_space<vmem>>, vector<8x128xbf16>
    %c0_1 = arith.constant 0 : index
    %c0_2 = arith.constant 0 : index
    %1 = vector.load %arg2[%c0_1, %c0_2] : memref<128x128xbf16, #tpu.memory_space<vmem>>, vector<128x128xbf16>
    %c0_3 = arith.constant 0 : index
    %c0_4 = arith.constant 0 : index
    %2 = vector.load %arg3[%c0_3, %c0_4] : memref<1x128xf32, #tpu.memory_space<vmem>>, vector<1x128xf32>
    %cst = arith.constant dense<0.000000e+00> : vector<8x128xf32>
    %3 = tpu.matmul %0, %1, %cst {dimension_numbers = #tpu.dot_dimension_numbers<[1], [0], [0], [1], [0, 0, 1, 1], [], []>} : vector<8x128xbf16>, vector<128x128xbf16>, vector<8x128xf32> -> vector<8x128xf32>
    %4 = vector.broadcast %2 : vector<1x128xf32> to vector<8x128xf32>
    %5 = arith.addf %3, %4 : vector<8x128xf32>
    %cst_5 = arith.constant 0.000000e+00 : f32
    %6 = vector.broadcast %cst_5 : f32 to vector<8x128xf32>
    %7 = arith.maximumf %5, %6 : vector<8x128xf32>
    %8 = arith.truncf %7 : vector<8x128xf32> to vector<8x128xbf16>
    %c0_6 = arith.constant 0 : index
    %c0_7 = arith.constant 0 : index
    %9 = vector.load %arg4[%c0_6, %c0_7] : memref<128x128xbf16, #tpu.memory_space<vmem>>, vector<128x128xbf16>
    %c0_8 = arith.constant 0 : index
    %c0_9 = arith.constant 0 : index
    %10 = vector.load %arg5[%c0_8, %c0_9] : memref<1x128xf32, #tpu.memory_space<vmem>>, vector<1x128xf32>
    %cst_10 = arith.constant dense<0.000000e+00> : vector<8x128xf32>
    %11 = tpu.matmul %8, %9, %cst_10 {dimension_numbers = #tpu.dot_dimension_numbers<[1], [0], [0], [1], [0, 0, 1, 1], [], []>} : vector<8x128xbf16>, vector<128x128xbf16>, vector<8x128xf32> -> vector<8x128xf32>
    %12 = vector.broadcast %10 : vector<1x128xf32> to vector<8x128xf32>
    %13 = arith.addf %11, %12 : vector<8x128xf32>
    %cst_11 = arith.constant 0.000000e+00 : f32
    %14 = vector.broadcast %cst_11 : f32 to vector<8x128xf32>
    %15 = arith.maximumf %13, %14 : vector<8x128xf32>
    %16 = arith.truncf %15 : vector<8x128xf32> to vector<8x128xbf16>
    %c0_12 = arith.constant 0 : index
    %c0_13 = arith.constant 0 : index
    %17 = vector.load %arg6[%c0_12, %c0_13] : memref<128x128xbf16, #tpu.memory_space<vmem>>, vector<128x128xbf16>
    %c0_14 = arith.constant 0 : index
    %c0_15 = arith.constant 0 : index
    %18 = vector.load %arg7[%c0_14, %c0_15] : memref<1x128xf32, #tpu.memory_space<vmem>>, vector<1x128xf32>
    %cst_16 = arith.constant dense<0.000000e+00> : vector<8x128xf32>
    %19 = tpu.matmul %16, %17, %cst_16 {dimension_numbers = #tpu.dot_dimension_numbers<[1], [0], [0], [1], [0, 0, 1, 1], [], []>} : vector<8x128xbf16>, vector<128x128xbf16>, vector<8x128xf32> -> vector<8x128xf32>
    %20 = vector.broadcast %18 : vector<1x128xf32> to vector<8x128xf32>
    %21 = arith.addf %19, %20 : vector<8x128xf32>
    %22 = math.tanh %21 : vector<8x128xf32>
    %c0_17 = arith.constant 0 : index
    %c0_18 = arith.constant 0 : index
    %23 = vector.load %arg8[%c0_17, %c0_18] : memref<8x128xf32, #tpu.memory_space<vmem>>, vector<8x128xf32>
    tpu.vector_store %arg8[%c0_17, %c0_18], %22 {strides = array<i32>} : memref<8x128xf32, #tpu.memory_space<vmem>>, vector<8x128xf32>,
    return
  }
  func.func @transform_0(%arg0: i32) -> (i32, i32) {
    %c0_i32 = arith.constant 0 : i32
    %c0_i32_0 = arith.constant 0 : i32
    return %arg0, %c0_i32 : i32, i32
  }
  func.func @transform_1(%arg0: i32) -> (i32, i32) {
    %c0_i32 = arith.constant 0 : i32
    %c0_i32_0 = arith.constant 0 : i32
    %c0_i32_1 = arith.constant 0 : i32
    return %c0_i32, %c0_i32_0 : i32, i32
  }
  func.func @transform_2(%arg0: i32) -> (i32, i32) {
    %c0_i32 = arith.constant 0 : i32
    %c0_i32_0 = arith.constant 0 : i32
    %c0_i32_1 = arith.constant 0 : i32
    return %c0_i32, %c0_i32_0 : i32, i32
  }
  func.func @transform_3(%arg0: i32) -> (i32, i32) {
    %c0_i32 = arith.constant 0 : i32
    %c0_i32_0 = arith.constant 0 : i32
    %c0_i32_1 = arith.constant 0 : i32
    return %c0_i32, %c0_i32_0 : i32, i32
  }
  func.func @transform_4(%arg0: i32) -> (i32, i32) {
    %c0_i32 = arith.constant 0 : i32
    %c0_i32_0 = arith.constant 0 : i32
    %c0_i32_1 = arith.constant 0 : i32
    return %c0_i32, %c0_i32_0 : i32, i32
  }
  func.func @transform_5(%arg0: i32) -> (i32, i32) {
    %c0_i32 = arith.constant 0 : i32
    %c0_i32_0 = arith.constant 0 : i32
    %c0_i32_1 = arith.constant 0 : i32
    return %c0_i32, %c0_i32_0 : i32, i32
  }
  func.func @transform_6(%arg0: i32) -> (i32, i32) {
    %c0_i32 = arith.constant 0 : i32
    %c0_i32_0 = arith.constant 0 : i32
    %c0_i32_1 = arith.constant 0 : i32
    return %c0_i32, %c0_i32_0 : i32, i32
  }
  func.func @transform_7(%arg0: i32) -> (i32, i32) {
    %c0_i32 = arith.constant 0 : i32
    %c0_i32_0 = arith.constant 0 : i32
    return %arg0, %c0_i32 : i32, i32
  }
}

</mosaic_0001>

<llo_original>
// kernel: _lambda_.1
$region0: #{_lambda_.1}
  #allocation0 [shape = 'u32[]', space=smem, size = 0x4, offset = 0x4, fixed_abs, tag = 'smem constant byte address 0x4 - core index']
  #allocation1 [shape = 'u32[72,128]{1,0:T(1,128)}', space=vmem, size = 0x9000, scoped, tag = 'internal scratch']
  %s0 = inlined_call_operand.vmem [shape: bf16[8,128], index: 0, kind: input, shape index: {}]
  %s1 = inlined_call_operand.hbm [shape: bf16[128,128], index: 1, kind: input, shape index: {}]
  %s2 = inlined_call_operand.vmem [shape: f32[1,128], index: 2, kind: input, shape index: {}]
  %s3 = inlined_call_operand.hbm [shape: bf16[128,128], index: 3, kind: input, shape index: {}]
  %s4 = inlined_call_operand.vmem [shape: f32[1,128], index: 4, kind: input, shape index: {}]
  %s5 = inlined_call_operand.hbm [shape: bf16[128,128], index: 5, kind: input, shape index: {}]
  %s6 = inlined_call_operand.vmem [shape: f32[1,128], index: 6, kind: input, shape index: {}]
  %s7 = inlined_call_operand.hbm [shape: f32[8,128], index: 7, kind: output, shape index: {}]
  %s8 = sld [smem:[#allocation0]]
  $region50: #{_lambda_.1} parent=0
    _
  %s10 = ssub.s32 1, %s8
  %s11 = scalar_select 0, %s10, %s8
  $region1: #{_lambda_.1} parent=0
    #allocation2 [shape = 'u8[32768]{0}', space=vmem, size = 0x8000, scoped, tag = 'input window, operand 1, single buffered']
    #allocation3 [shape = 's32[1]{0}', space=sflag, size = 0x4, scoped, tag = 'scoped memory for _lambda_.1']
    #allocation4 [shape = 's32[1]{0}', space=sflag, size = 0x4, scoped, tag = 'scoped memory for _lambda_.1']
    #allocation5 [shape = 'u8[32768]{0}', space=vmem, size = 0x8000, scoped, tag = 'input window, operand 3, single buffered']
    #allocation6 [shape = 's32[1]{0}', space=sflag, size = 0x4, scoped, tag = 'scoped memory for _lambda_.1']
    #allocation7 [shape = 'u8[32768]{0}', space=vmem, size = 0x8000, scoped, tag = 'input window, operand 5, single buffered']
    #allocation8 [shape = 'u8[4096]{0}', space=vmem, size = 0x1000, scoped, tag = 'output window, operand 0, single buffered']
    %12 = vsyncpa [#allocation3], 0
    %13 = vsyncpa [#allocation6], 0
    %14 = vsyncpa [#allocation4], 0
    // Predicated region
    $region2: #{_lambda_.1} parent=1 // pred_check
      _
    $region3: #{_lambda_.1} parent=1 // pred_check_branch
      %16 = sbr.rel (0) target = $region5
    $region4: #{_lambda_.1} parent=1 // pred_region
      _
    $region5: #{_lambda_.1} parent=1 // pred_fallthru
      _
    // Predicated region
    $region6: #{_lambda_.1} parent=1 // pred_check
      _
    $region7: #{_lambda_.1} parent=1 // pred_check_branch
      %18 = sbr.rel (0) target = $region9
    $region8: #{_lambda_.1} parent=1 // pred_region
      %20 = vsyncadd [#allocation3], 0
      %s21 = sshll.u32 %s1, 4
      %s22 = int_to_ptr.hbm [resolvable:$true] %s21
      %s23 = sshll.u32 [#allocation2], 4
      %s24 = int_to_ptr.vmem [resolvable:$true] %s23
      %29 = dma.hbm_to_vmem [thread:$0]  %s22, 1024, %s24, [#allocation3], 64, 64, 4
    $region9: #{_lambda_.1} parent=1 // pred_fallthru
      _
    // Predicated region
    $region10: #{_lambda_.1} parent=1 // pred_check
      _
    $region11: #{_lambda_.1} parent=1 // pred_check_branch
      %31 = sbr.rel (0) target = $region13
    $region12: #{_lambda_.1} parent=1 // pred_region
      _
    $region13: #{_lambda_.1} parent=1 // pred_fallthru
      _
    // Predicated region
    $region14: #{_lambda_.1} parent=1 // pred_check
      _
    $region15: #{_lambda_.1} parent=1 // pred_check_branch
      %33 = sbr.rel (0) target = $region17
    $region16: #{_lambda_.1} parent=1 // pred_region
      %35 = vsyncadd [#allocation6], 0
      %s36 = sshll.u32 %s3, 4
      %s37 = int_to_ptr.hbm [resolvable:$true] %s36
      %s38 = sshll.u32 [#allocation5], 4
      %s39 = int_to_ptr.vmem [resolvable:$true] %s38
      %44 = dma.hbm_to_vmem [thread:$0]  %s37, 1024, %s39, [#allocation6], 64, 64, 4
    $region17: #{_lambda_.1} parent=1 // pred_fallthru
      _
    // Predicated region
    $region18: #{_lambda_.1} parent=1 // pred_check
      _
    $region19: #{_lambda_.1} parent=1 // pred_check_branch
      %46 = sbr.rel (0) target = $region21
    $region20: #{_lambda_.1} parent=1 // pred_region
      _
    $region21: #{_lambda_.1} parent=1 // pred_fallthru
      _
    // Predicated region
    $region22: #{_lambda_.1} parent=1 // pred_check
      _
    $region23: #{_lambda_.1} parent=1 // pred_check_branch
      %48 = sbr.rel (0) target = $region25
    $region24: #{_lambda_.1} parent=1 // pred_region
      %50 = vsyncadd [#allocation6], 0
      %s51 = sshll.u32 %s5, 4
      %s52 = int_to_ptr.hbm [resolvable:$true] %s51
      %s53 = sshll.u32 [#allocation7], 4
      %s54 = int_to_ptr.vmem [resolvable:$true] %s53
      %59 = dma.hbm_to_vmem [thread:$0]  %s52, 1024, %s54, [#allocation6], 64, 64, 4
    $region25: #{_lambda_.1} parent=1 // pred_fallthru
      _
    // Predicated region
    $region26: #{_lambda_.1} parent=1 // pred_check
      _
    $region27: #{_lambda_.1} parent=1 // pred_check_branch
      %61 = sbr.rel (0) target = $region29
    $region28: #{_lambda_.1} parent=1 // pred_region
      _
    $region29: #{_lambda_.1} parent=1 // pred_fallthru
      _
    // Predicated region
    $region30: #{_lambda_.1} parent=1 // pred_check
      _
    $region31: #{_lambda_.1} parent=1 // pred_check_branch
      %63 = sbr.rel (0) target = $region33
    $region32: #{_lambda_.1} parent=1 // pred_region
      %65 = dma.done [#allocation3], 1024
    $region33: #{_lambda_.1} parent=1 // pred_fallthru
      _
    // Predicated region
    $region34: #{_lambda_.1} parent=1 // pred_check
      _
    $region35: #{_lambda_.1} parent=1 // pred_check_branch
      %67 = sbr.rel (0) target = $region37
    $region36: #{_lambda_.1} parent=1 // pred_region
      %69 = dma.done [#allocation6], 1024
    $region37: #{_lambda_.1} parent=1 // pred_fallthru
      _
    // Predicated region
    $region38: #{_lambda_.1} parent=1 // pred_check
      _
    $region39: #{_lambda_.1} parent=1 // pred_check_branch
      %71 = sbr.rel (0) target = $region41
    $region40: #{_lambda_.1} parent=1 // pred_region
      %73 = dma.done [#allocation6], 1024
    $region41: #{_lambda_.1} parent=1 // pred_fallthru
      _
    %v74 = vld [vmem:[%s0] sm:$0xf]
    %v75 = vld [vmem:[#allocation2] sm:$0xf]
    %v76 = vld [vmem:[#allocation2 + $0x4] sm:$0xf]
    %v77 = vld [vmem:[#allocation2 + $0x8] sm:$0xf]
    %v78 = vld [vmem:[#allocation2 + $0xc] sm:$0xf]
    %v79 = vld [vmem:[#allocation2 + $0x10] sm:$0xf]
    %v80 = vld [vmem:[#allocation2 + $0x14] sm:$0xf]
    %v81 = vld [vmem:[#allocation2 + $0x18] sm:$0xf]
    %v82 = vld [vmem:[#allocation2 + $0x1c] sm:$0xf]
    %v83 = vld [vmem:[#allocation2 + $0x20] sm:$0xf]
    %v84 = vld [vmem:[#allocation2 + $0x24] sm:$0xf]
    %v85 = vld [vmem:[#allocation2 + $0x28] sm:$0xf]
    %v86 = vld [vmem:[#allocation2 + $0x2c] sm:$0xf]
    %v87 = vld [vmem:[#allocation2 + $0x30] sm:$0xf]
    %v88 = vld [vmem:[#allocation2 + $0x34] sm:$0xf]
    %v89 = vld [vmem:[#allocation2 + $0x38] sm:$0xf]
    %v90 = vld [vmem:[#allocation2 + $0x3c] sm:$0xf]
    %v91 = vld [vmem:[%s2] sm:$0x1]
    %v93 = vperm.slane %v91, 0
    %v111 = vunpack.c.l.b16 %v75
    %v112 = vunpack.c.l.b16 %v76
    %v113 = vunpack.c.l.b16 %v77
    %v114 = vunpack.c.l.b16 %v78
    %v115 = vunpack.c.l.b16 %v79
    %v116 = vunpack.c.l.b16 %v80
    %v117 = vunpack.c.l.b16 %v81
    %v118 = vunpack.c.l.b16 %v82
    %v119 = vunpack.c.l.b16 %v83
    %v120 = vunpack.c.l.b16 %v84
    %v121 = vunpack.c.l.b16 %v85
    %v122 = vunpack.c.l.b16 %v86
    %v123 = vunpack.c.l.b16 %v87
    %v124 = vunpack.c.l.b16 %v88
    %v125 = vunpack.c.l.b16 %v89
    %v126 = vunpack.c.l.b16 %v90
    %v127 = vpack.c.b16 %v112, %v111
    %v128 = vpack.c.b16 %v114, %v113
    %v129 = vpack.c.b16 %v116, %v115
    %v130 = vpack.c.b16 %v118, %v117
    %v131 = vpack.c.b16 %v120, %v119
    %v132 = vpack.c.b16 %v122, %v121
    %v133 = vpack.c.b16 %v124, %v123
    %v134 = vpack.c.b16 %v126, %v125
    %143 = vmatpush.bf16.msra.mxu0 %v134
    %144 = vmatpush.bf16.msra.mxu0 %v133
    %145 = vmatpush.bf16.msra.mxu0 %v132
    %146 = vmatpush.bf16.msra.mxu0 %v131
    %147 = vmatpush.bf16.msra.mxu0 %v130
    %148 = vmatpush.bf16.msra.mxu0 %v129
    %149 = vmatpush.bf16.msra.mxu0 %v128
    %150 = vmatpush.bf16.msra.mxu0 %v127
    %151 = vmatmul.bf16.gmra.mxu0 %v74
    %v152 = vpop.f32.mrf.mxu0
    %v153 = vadd.f32 %v93, %v152
    %v154 = vpop.f32.mrf.mxu0
    %155 = vdwg.mxu0
    %v156 = vmax.f32 %v153, 0.0
    %v157 = vpack.c.bf16 %v156, %v156
    %v158 = vld [vmem:[#allocation5] sm:$0xf]
    %v159 = vld [vmem:[#allocation5 + $0x4] sm:$0xf]
    %v160 = vld [vmem:[#allocation5 + $0x8] sm:$0xf]
    %v161 = vld [vmem:[#allocation5 + $0xc] sm:$0xf]
    %v162 = vld [vmem:[#allocation5 + $0x10] sm:$0xf]
    %v163 = vld [vmem:[#allocation5 + $0x14] sm:$0xf]
    %v164 = vld [vmem:[#allocation5 + $0x18] sm:$0xf]
    %v165 = vld [vmem:[#allocation5 + $0x1c] sm:$0xf]
    %v166 = vld [vmem:[#allocation5 + $0x20] sm:$0xf]
    %v167 = vld [vmem:[#allocation5 + $0x24] sm:$0xf]
    %v168 = vld [vmem:[#allocation5 + $0x28] sm:$0xf]
    %v169 = vld [vmem:[#allocation5 + $0x2c] sm:$0xf]
    %v170 = vld [vmem:[#allocation5 + $0x30] sm:$0xf]
    %v171 = vld [vmem:[#allocation5 + $0x34] sm:$0xf]
    %v172 = vld [vmem:[#allocation5 + $0x38] sm:$0xf]
    %v173 = vld [vmem:[#allocation5 + $0x3c] sm:$0xf]
    %v174 = vld [vmem:[%s4] sm:$0x1]
    %v176 = vperm.slane %v174, 0
    %v194 = vunpack.c.l.b16 %v158
    %v195 = vunpack.c.l.b16 %v159
    %v196 = vunpack.c.l.b16 %v160
    %v197 = vunpack.c.l.b16 %v161
    %v198 = vunpack.c.l.b16 %v162
    %v199 = vunpack.c.l.b16 %v163
    %v200 = vunpack.c.l.b16 %v164
    %v201 = vunpack.c.l.b16 %v165
    %v202 = vunpack.c.l.b16 %v166
    %v203 = vunpack.c.l.b16 %v167
    %v204 = vunpack.c.l.b16 %v168
    %v205 = vunpack.c.l.b16 %v169
    %v206 = vunpack.c.l.b16 %v170
    %v207 = vunpack.c.l.b16 %v171
    %v208 = vunpack.c.l.b16 %v172
    %v209 = vunpack.c.l.b16 %v173
    %v210 = vpack.c.b16 %v195, %v194
    %v211 = vpack.c.b16 %v197, %v196
    %v212 = vpack.c.b16 %v199, %v198
    %v213 = vpack.c.b16 %v201, %v200
    %v214 = vpack.c.b16 %v203, %v202
    %v215 = vpack.c.b16 %v205, %v204
    %v216 = vpack.c.b16 %v207, %v206
    %v217 = vpack.c.b16 %v209, %v208
    %226 = vmatpush.bf16.msra.mxu0 %v217
    %227 = vmatpush.bf16.msra.mxu0 %v216
    %228 = vmatpush.bf16.msra.mxu0 %v215
    %229 = vmatpush.bf16.msra.mxu0 %v214
    %230 = vmatpush.bf16.msra.mxu0 %v213
    %231 = vmatpush.bf16.msra.mxu0 %v212
    %232 = vmatpush.bf16.msra.mxu0 %v211
    %233 = vmatpush.bf16.msra.mxu0 %v210
    %234 = vmatmul.bf16.gmra.mxu0 %v157
    %v235 = vpop.f32.mrf.mxu0
    %v236 = vadd.f32 %v176, %v235
    %v237 = vpop.f32.mrf.mxu0
    %238 = vdwg.mxu0
    %v239 = vmax.f32 %v236, 0.0
    %v240 = vpack.c.bf16 %v239, %v239
    %v241 = vld [vmem:[#allocation7] sm:$0xf]
    %v242 = vld [vmem:[#allocation7 + $0x4] sm:$0xf]
    %v243 = vld [vmem:[#allocation7 + $0x8] sm:$0xf]
    %v244 = vld [vmem:[#allocation7 + $0xc] sm:$0xf]
    %v245 = vld [vmem:[#allocation7 + $0x10] sm:$0xf]
    %v246 = vld [vmem:[#allocation7 + $0x14] sm:$0xf]
    %v247 = vld [vmem:[#allocation7 + $0x18] sm:$0xf]
    %v248 = vld [vmem:[#allocation7 + $0x1c] sm:$0xf]
    %v249 = vld [vmem:[#allocation7 + $0x20] sm:$0xf]
    %v250 = vld [vmem:[#allocation7 + $0x24] sm:$0xf]
    %v251 = vld [vmem:[#allocation7 + $0x28] sm:$0xf]
    %v252 = vld [vmem:[#allocation7 + $0x2c] sm:$0xf]
    %v253 = vld [vmem:[#allocation7 + $0x30] sm:$0xf]
    %v254 = vld [vmem:[#allocation7 + $0x34] sm:$0xf]
    %v255 = vld [vmem:[#allocation7 + $0x38] sm:$0xf]
    %v256 = vld [vmem:[#allocation7 + $0x3c] sm:$0xf]
    %v257 = vld [vmem:[%s6] sm:$0x1]
    %v259 = vperm.slane %v257, 0
    %v277 = vunpack.c.l.b16 %v241
    %v278 = vunpack.c.l.b16 %v242
    %v279 = vunpack.c.l.b16 %v243
    %v280 = vunpack.c.l.b16 %v244
    %v281 = vunpack.c.l.b16 %v245
    %v282 = vunpack.c.l.b16 %v246
    %v283 = vunpack.c.l.b16 %v247
    %v284 = vunpack.c.l.b16 %v248
    %v285 = vunpack.c.l.b16 %v249
    %v286 = vunpack.c.l.b16 %v250
    %v287 = vunpack.c.l.b16 %v251
    %v288 = vunpack.c.l.b16 %v252
    %v289 = vunpack.c.l.b16 %v253
    %v290 = vunpack.c.l.b16 %v254
    %v291 = vunpack.c.l.b16 %v255
    %v292 = vunpack.c.l.b16 %v256
    %v293 = vpack.c.b16 %v278, %v277
    %v294 = vpack.c.b16 %v280, %v279
    %v295 = vpack.c.b16 %v282, %v281
    %v296 = vpack.c.b16 %v284, %v283
    %v297 = vpack.c.b16 %v286, %v285
    %v298 = vpack.c.b16 %v288, %v287
    %v299 = vpack.c.b16 %v290, %v289
    %v300 = vpack.c.b16 %v292, %v291
    %309 = vmatpush.bf16.msra.mxu0 %v300
    %310 = vmatpush.bf16.msra.mxu0 %v299
    %311 = vmatpush.bf16.msra.mxu0 %v298
    %312 = vmatpush.bf16.msra.mxu0 %v297
    %313 = vmatpush.bf16.msra.mxu0 %v296
    %314 = vmatpush.bf16.msra.mxu0 %v295
    %315 = vmatpush.bf16.msra.mxu0 %v294
    %316 = vmatpush.bf16.msra.mxu0 %v293
    %317 = vmatmul.bf16.gmra.mxu0 %v240
    %v318 = vpop.f32.mrf.mxu0
    %v319 = vadd.f32 %v259, %v318
    %v320 = vpop.f32.mrf.mxu0
    %321 = vdwg.mxu0
    %v322 = vtanh.pop %v319
    %323 = vst [vmem:[#allocation8] sm:$0xff] %v322
    // Predicated region
    $region42: #{_lambda_.1} parent=1 // pred_check
      _
    $region43: #{_lambda_.1} parent=1 // pred_check_branch
      %325 = sbr.rel (0) target = $region45
    $region44: #{_lambda_.1} parent=1 // pred_region
      %327 = vsyncadd [#allocation4], 0
      %s329 = sshll.u32 [#allocation8], 4
      %s330 = int_to_ptr.vmem [resolvable:$true] %s329
      %s331 = sshll.u32 %s7, 4
      %s332 = int_to_ptr.hbm [resolvable:$true] %s331
      %334 = dma.vmem_to_hbm [thread:$0]  %s330, 128, %s332, [#allocation4]
    $region45: #{_lambda_.1} parent=1 // pred_fallthru
      _
    // Predicated region
    $region46: #{_lambda_.1} parent=1 // pred_check
      _
    $region47: #{_lambda_.1} parent=1 // pred_check_branch
      %336 = sbr.rel (0) target = $region49
    $region48: #{_lambda_.1} parent=1 // pred_region
      %338 = dma.done [#allocation4], 128
    $region49: #{_lambda_.1} parent=1 // pred_fallthru
      _
    %339 = vsyncpa [#allocation3], 1
    %340 = vsyncpa [#allocation6], 1
    %341 = vsyncpa [#allocation4], 1

</llo_original>
